<compile_context>
chip_gen: v6e
topology: v6e:2x2x1
jax: 0.10.0
libtpu: 0.0.40
codegen_flags: <defaults>
</compile_context>

<pallas_src>
import jax
import jax.numpy as jnp
from jax.experimental import pallas as pl
from jax.experimental.pallas import tpu as pltpu

LANE = 128


def _rup(x, m):
    return (x + m - 1) // m * m


def _cdiv(a, b):
    return -(-a // b)


# ----------------------------------------------------------------------------- kernel
def transition_kernel(x_ref, w_ref, b_ref, o_ref):
    """Fused 2x2 avg-pool + (BN-folded) 1x1 conv.

    x_ref : [tr, 2, Wp, 2*Kp] bf16  -- tr row-pairs; axis 1 = row parity; for each
            output column the two input columns' channels sit side by side on the
            last (lane) axis as [even-col Kp | odd-col Kp].
    w_ref : [2*Kp, Npad] bf16       -- BN/0.25-folded conv weight stacked twice along K,
            so the column-pair sum of the pool happens inside the MXU contraction.
    b_ref : [1, Npad] f32           -- BN shift folded through the conv.
    o_ref : [tr*Wp, Npad] bf16.
    """
    x = x_ref[...]
    # Row-pair sum of the 2x2 window (bf16 VALU on v6e/v7x; emulated via f32 on v5e).
    s = x[:, 0] + x[:, 1]                                   # [tr, Wp, 2*Kp]
    # Layout-trivial collapse (Wp is a multiple of 8, so sublane tiling is unchanged).
    s = s.reshape(s.shape[0] * s.shape[1], s.shape[2])      # [tr*Wp, 2*Kp]
    # Column-pair sum + 1x1 conv in a single MXU matmul, f32 accumulation.
    y = jnp.dot(s, w_ref[...], preferred_element_type=jnp.float32)
    o_ref[...] = (y + b_ref[...]).astype(o_ref.dtype)


# ---------------------------------------------------------------------------- wrapper
def transition_forward(x_nchw, bn_gamma, bn_beta, bn_mean, bn_var, conv_w, eps=1e-5):
    """Transition.forward: BatchNorm2d (eval) -> Conv2d(1x1, bias=False) -> AvgPool2d(2,2).

    x_nchw: [N, C_in, H, W] float32 (PyTorch layout).
    conv_w: [C_out, C_in] (or torch OIHW [C_out, C_in, 1, 1]).
    Returns [N, C_out, H//2, W//2] float32 (NCHW, like the PyTorch module).
    """
    N, C, H, W = x_nchw.shape
    if conv_w.ndim == 4:                       # torch OIHW [C_out, C_in, 1, 1]
        conv_w = conv_w[:, :, 0, 0]
    C_out = conv_w.shape[0]
    Ho, Wo = H // 2, W // 2

    Kp = _rup(C, LANE)
    Npad = _rup(C_out, LANE)
    Wp = _rup(Wo, 8)      # pad output width to a sublane multiple -> every block/reshape
                          # in the kernel is (8,128)-aligned and layout-trivial.

    # ---- fold BN (eval, running stats) + the 0.25 pooling factor into weight / bias (f32).
    scale = bn_gamma.astype(jnp.float32) * jax.lax.rsqrt(bn_var.astype(jnp.float32) + eps)
    shift = bn_beta.astype(jnp.float32) - bn_mean.astype(jnp.float32) * scale
    w = conv_w.astype(jnp.float32).T                          # [C, C_out]
    w_folded = (0.25 * scale)[:, None] * w                    # 0.25 * diag(scale) @ W
    bias = shift @ w                                          # shift @ W (pool leaves it as-is)

    wf = jnp.pad(w_folded, ((0, Kp - C), (0, Npad - C_out))).astype(jnp.bfloat16)
    w2 = jnp.concatenate([wf, wf], axis=0)                    # [2*Kp, Npad]
    bp = jnp.pad(bias, (0, Npad - C_out)).reshape(1, Npad)    # [1, Npad] f32

    # ---- ONE fused activation pass: transpose + crop + bf16 cast + (W, C) zero-pad.
    x = jnp.transpose(x_nchw, (0, 2, 3, 1))[:, :2 * Ho, :2 * Wo, :].astype(jnp.bfloat16)
    x = jnp.pad(x, ((0, 0), (0, 0), (0, 2 * (Wp - Wo)), (0, Kp - C)))
    # Bitcast-only reshape: rows = (n, ho) pairs; axis1 = row parity; axis2 = output
    # column; last axis = [even-col channels | odd-col channels] for that column.
    X = x.reshape(N * Ho, 2, Wp, 2 * Kp)

    R = N * Ho                     # number of output-row groups (grid axis)
    Mp = R * Wp                    # GEMM rows (includes Wp-Wo padded columns, cropped later)

    # ---- tile selection: ~512 GEMM rows per step, but >= 8 grid steps when M permits
    # (v7x megacore: >= 4 pipelined steps per TensorCore). Shrink if VMEM gets tight.
    tr = max(1, min(max(1, 512 // Wp), max(1, R // 8)))

    def vmem_est(t):
        return (2 * t * 2 * Wp * 2 * Kp * 2        # double-buffered bf16 input block
                + 2 * t * Wp * Npad * 2            # double-buffered bf16 output block
                + 2 * 2 * Kp * Npad * 2            # (double-buffered) bf16 weight
                + 2 * Npad * 4)                    # f32 bias

    while tr > 1 and vmem_est(tr) > 12 * 2 ** 20:
        tr //= 2
    if tr >= R:
        tr = R                                     # single full block (always legal)

    grid = _cdiv(R, tr)
    # Padded columns come out as `bias` and partial last-block rows are masked; both are
    # cropped in the epilogue — do not remove the crops below.
    out = pl.pallas_call(
        transition_kernel,
        out_shape=jax.ShapeDtypeStruct((Mp, Npad), jnp.bfloat16),
        grid=(grid,),
        in_specs=[
            pl.BlockSpec((tr, 2, Wp, 2 * Kp), lambda i: (i, 0, 0, 0)),
            pl.BlockSpec((2 * Kp, Npad), lambda i: (0, 0)),   # folded weight (resident)
            pl.BlockSpec((1, Npad), lambda i: (0, 0)),        # folded bias   (resident)
        ],
        out_specs=pl.BlockSpec((tr * Wp, Npad), lambda i: (i, 0)),
        compiler_params=pltpu.CompilerParams(
            dimension_semantics=("parallel",),
            vmem_limit_bytes=int(min(40 * 2 ** 20, max(24 * 2 ** 20, 2 * vmem_est(tr)))),
        ),
    )(X, w2, bp)

    # ---- single fused epilogue pass: crop pads, NHWC->NCHW, cast back to input dtype.
    y = out.reshape(N, Ho, Wp, Npad)[:, :, :Wo, :C_out]
    return jnp.transpose(y, (0, 3, 1, 2)).astype(x_nchw.dtype)


# ----------------------------------------------------------------------- pure-JAX ref
def transition_reference(x, gamma, beta, mean, var, w, eps=1e-5):
    s = gamma * jax.lax.rsqrt(var + eps)
    sh = beta - mean * s
    xb = x * s[None, :, None, None] + sh[None, :, None, None]
    y = jnp.einsum('nchw,oc->nohw', xb, w)
    N, O, H, W = y.shape
    Ho, Wo = H // 2, W // 2
    y = y[:, :, :2 * Ho, :2 * Wo].reshape(N, O, Ho, 2, Wo, 2).mean(axis=(3, 5))
    return y


if __name__ == "__main__":
    key = jax.random.PRNGKey(0)
    kx, kg, kb, km, kv, kw = jax.random.split(key, 6)
    N, C_in, C_out, H, W = 2, 32, 16, 16, 16

    x = jax.random.normal(kx, (N, C_in, H, W), jnp.float32)
    gamma = 1.0 + 0.1 * jax.random.normal(kg, (C_in,), jnp.float32)
    beta = 0.1 * jax.random.normal(kb, (C_in,), jnp.float32)
    mean = 0.1 * jax.random.normal(km, (C_in,), jnp.float32)
    var = jnp.abs(jax.random.normal(kv, (C_in,), jnp.float32)) + 0.5
    conv_w = 0.1 * jax.random.normal(kw, (C_out, C_in), jnp.float32)

    out = jax.block_until_ready(
        jax.jit(transition_forward)(x, gamma, beta, mean, var, conv_w))
    assert out.shape == (N, C_out, H // 2, W // 2), out.shape
    assert bool(jnp.all(jnp.isfinite(out)))

    ref = transition_reference(x, gamma, beta, mean, var, conv_w)
    # bf16 activations / weights / output (f32 accumulation): relaxed tolerance vs f32 ref.
    err = float(jnp.max(jnp.abs(out - ref)))
    assert bool(jnp.allclose(out, ref, atol=4e-2, rtol=4e-2)), err
    print("KERNEL_OK")
</pallas_src>

<mosaic_0001>
module attributes {stable_mosaic.version = 11 : i64} {
  func.func @transition_kernel(%arg0: i32, %arg1: memref<2x2x8x256xbf16, #tpu.memory_space<vmem>>, %arg2: memref<256x128xbf16, #tpu.memory_space<vmem>>, %arg3: memref<1x128xf32, #tpu.memory_space<vmem>>, %arg4: memref<16x128xbf16, #tpu.memory_space<vmem>>) attributes {dimension_semantics = [#tpu.dimension_semantics<parallel>], iteration_bounds = array<i64: 8>, scalar_prefetch = 0 : i64, scratch_operands = 0 : i64, tpu.core_type = #tpu.core_type<tc>, window_params = [{transform_indices = @transform_0, window_bounds = array<i64: 2, 2, 8, 256>}, {pipeline_mode = #tpu.pipeline_mode<synchronous>, transform_indices = @transform_1, window_bounds = array<i64: 256, 128>}, {pipeline_mode = #tpu.pipeline_mode<synchronous>, transform_indices = @transform_2, window_bounds = array<i64: 1, 128>}, {transform_indices = @transform_3, window_bounds = array<i64: 16, 128>}]} {
    %c0 = arith.constant 0 : index
    %c0_0 = arith.constant 0 : index
    %c0_1 = arith.constant 0 : index
    %c0_2 = arith.constant 0 : index
    %0 = vector.load %arg1[%c0, %c0_0, %c0_1, %c0_2] : memref<2x2x8x256xbf16, #tpu.memory_space<vmem>>, vector<2x2x8x256xbf16>
    %1 = vector.extract_strided_slice %0 {offsets = [0, 0, 0, 0], sizes = [2, 1, 8, 256], strides = [1, 1, 1, 1]} : vector<2x2x8x256xbf16> to vector<2x1x8x256xbf16>
    %2 = vector.shape_cast %1 : vector<2x1x8x256xbf16> to vector<2x8x256xbf16>
    %3 = vector.extract_strided_slice %0 {offsets = [0, 1, 0, 0], sizes = [2, 1, 8, 256], strides = [1, 1, 1, 1]} : vector<2x2x8x256xbf16> to vector<2x1x8x256xbf16>
    %4 = vector.shape_cast %3 : vector<2x1x8x256xbf16> to vector<2x8x256xbf16>
    %5 = arith.addf %2, %4 : vector<2x8x256xbf16>
    %6 = vector.shape_cast %5 : vector<2x8x256xbf16> to vector<16x256xbf16>
    %c0_3 = arith.constant 0 : index
    %c0_4 = arith.constant 0 : index
    %7 = vector.load %arg2[%c0_3, %c0_4] : memref<256x128xbf16, #tpu.memory_space<vmem>>, vector<256x128xbf16>
    %cst = arith.constant dense<0.000000e+00> : vector<16x128xf32>
    %8 = tpu.matmul %6, %7, %cst {dimension_numbers = #tpu.dot_dimension_numbers<[1], [0], [0], [1], [0, 0, 1, 1], [], []>} : vector<16x256xbf16>, vector<256x128xbf16>, vector<16x128xf32> -> vector<16x128xf32>
    %c0_5 = arith.constant 0 : index
    %c0_6 = arith.constant 0 : index
    %9 = vector.load %arg3[%c0_5, %c0_6] : memref<1x128xf32, #tpu.memory_space<vmem>>, vector<1x128xf32>
    %10 = vector.broadcast %9 : vector<1x128xf32> to vector<16x128xf32>
    %11 = arith.addf %8, %10 : vector<16x128xf32>
    %12 = arith.truncf %11 : vector<16x128xf32> to vector<16x128xbf16>
    %c0_7 = arith.constant 0 : index
    %c0_8 = arith.constant 0 : index
    %13 = vector.load %arg4[%c0_7, %c0_8] : memref<16x128xbf16, #tpu.memory_space<vmem>>, vector<16x128xbf16>
    tpu.vector_store %arg4[%c0_7, %c0_8], %12 {strides = array<i32>} : memref<16x128xbf16, #tpu.memory_space<vmem>>, vector<16x128xbf16>,
    return
  }
  func.func @transform_0(%arg0: i32) -> (i32, i32, i32, i32) {
    %c0_i32 = arith.constant 0 : i32
    %c0_i32_0 = arith.constant 0 : i32
    %c0_i32_1 = arith.constant 0 : i32
    %c0_i32_2 = arith.constant 0 : i32
    return %arg0, %c0_i32, %c0_i32_0, %c0_i32_1 : i32, i32, i32, i32
  }
  func.func @transform_1(%arg0: i32) -> (i32, i32) {
    %c0_i32 = arith.constant 0 : i32
    %c0_i32_0 = arith.constant 0 : i32
    %c0_i32_1 = arith.constant 0 : i32
    return %c0_i32, %c0_i32_0 : i32, i32
  }
  func.func @transform_2(%arg0: i32) -> (i32, i32) {
    %c0_i32 = arith.constant 0 : i32
    %c0_i32_0 = arith.constant 0 : i32
    %c0_i32_1 = arith.constant 0 : i32
    return %c0_i32, %c0_i32_0 : i32, i32
  }
  func.func @transform_3(%arg0: i32) -> (i32, i32) {
    %c0_i32 = arith.constant 0 : i32
    %c0_i32_0 = arith.constant 0 : i32
    return %arg0, %c0_i32 : i32, i32
  }
}

</mosaic_0001>

<llo_original>
// kernel: transition_forward.1
$region0: #{transition_forward.1}
  #allocation0 [shape = 'u32[]', space=smem, size = 0x4, offset = 0x4, fixed_abs, tag = 'smem constant byte address 0x4 - core index']
  #allocation1 [shape = 'u32[144,128]{1,0:T(1,128)}', space=vmem, size = 0x12000, scoped, tag = 'internal scratch']
  %s0 = inlined_call_operand.vmem [shape: bf16[16,2,8,256], index: 0, kind: input, shape index: {}]
  %s1 = inlined_call_operand.vmem [shape: bf16[256,128], index: 1, kind: input, shape index: {}]
  %s2 = inlined_call_operand.vmem [shape: f32[1,128], index: 2, kind: input, shape index: {}]
  %s3 = inlined_call_operand.vmem [shape: bf16[128,128], index: 3, kind: output, shape index: {}]
  %s4 = sld [smem:[#allocation0]]
  $region45: #{transition_forward.1} parent=0
    _
  %s6 = ssub.s32 1, %s4
  %s7 = scalar_select 0, %s6, %s4
  loop: start=0, step=1, limit=10
  $region2: #{transition_forward.1} parent=0 // loop_pre_header
    _
  $region3: #{transition_forward.1} parent=0 // loop_header
    %s9 = sphi 0, %s13
    %p10 = scmp.ge.s32.totalorder %s9, 10
    %s19 = sphi 0, %s21
    %s22 = sphi 0, %s19
    %s23 = sphi 0, %s22
    %s39 = sphi 0, %s23
    %s43 = sphi 0, %s43
    %s45 = sphi 0, %s43
    %s46 = sphi 0, %s45
    %s60 = sphi 0, %s46
    %s64 = sphi 0, %s64
    %s66 = sphi 0, %s64
    %s67 = sphi 0, %s66
    %s81 = sphi 0, %s67
    %s87 = sphi 0, %s89
    %s90 = sphi 0, %s87
    %s91 = sphi 0, %s90
    %s107 = sphi 0, %s91
  $region4: #{transition_forward.1} parent=0 // loop_header_branch
    %12 = sbr.rel (%p10) target = $region8
  $region5: #{transition_forward.1} parent=0 // loop_body
    %s14 = ssub.s32 %s9, 1
    %s15 = ssub.s32 %s9, 2
    %s16 = sadd.s32 %s9, 1
    %s17 = ssub.s32 %s9, %s16
    %p18 = scmp.eq.s32.totalorder %s17, 0
    %s20 = sadd.s32 %s19, 1
    %s21 = scalar_select %p18, %s19, %s20
    %p24 = pneg %p18
    %p25 = scmp.eq.s32.totalorder %s9, 7
    %p26 = por %p24, %p25
    %p27 = scmp.ne.s32.totalorder %s19, %s22
    %p28 = scmp.eq.s32.totalorder %s9, 0
    %p29 = por %p27, %p28
    %p30 = scmp.ne.s32.totalorder %s19, %s22
    %p31 = scmp.eq.s32.totalorder %s14, 7
    %p32 = por %p30, %p31
    %p33 = scmp.ne.s32.totalorder %s22, %s23
    %p34 = scmp.eq.s32.totalorder %s14, 0
    %p35 = por %p33, %p34
    %p36 = scmp.ne.s32.totalorder %s22, %s23
    %p37 = scmp.eq.s32.totalorder %s15, 7
    %p38 = por %p36, %p37
    %p40 = scmp.ne.s32.totalorder %s23, %s39
    %p41 = scmp.eq.s32.totalorder %s15, 0
    %p42 = por %p40, %p41
    %s44 = sadd.s32 %s43, 1
    %p47 = scmp.eq.s32.totalorder %s9, 7
    %p48 = scmp.ne.s32.totalorder %s43, %s45
    %p49 = scmp.eq.s32.totalorder %s9, 0
    %p50 = por %p48, %p49
    %p51 = scmp.ne.s32.totalorder %s43, %s45
    %p52 = scmp.eq.s32.totalorder %s14, 7
    %p53 = por %p51, %p52
    %p54 = scmp.ne.s32.totalorder %s45, %s46
    %p55 = scmp.eq.s32.totalorder %s14, 0
    %p56 = por %p54, %p55
    %p57 = scmp.ne.s32.totalorder %s45, %s46
    %p58 = scmp.eq.s32.totalorder %s15, 7
    %p59 = por %p57, %p58
    %p61 = scmp.ne.s32.totalorder %s46, %s60
    %p62 = scmp.eq.s32.totalorder %s15, 0
    %p63 = por %p61, %p62
    %s65 = sadd.s32 %s64, 1
    %p68 = scmp.eq.s32.totalorder %s9, 7
    %p69 = scmp.ne.s32.totalorder %s64, %s66
    %p70 = scmp.eq.s32.totalorder %s9, 0
    %p71 = por %p69, %p70
    %p72 = scmp.ne.s32.totalorder %s64, %s66
    %p73 = scmp.eq.s32.totalorder %s14, 7
    %p74 = por %p72, %p73
    %p75 = scmp.ne.s32.totalorder %s66, %s67
    %p76 = scmp.eq.s32.totalorder %s14, 0
    %p77 = por %p75, %p76
    %p78 = scmp.ne.s32.totalorder %s66, %s67
    %p79 = scmp.eq.s32.totalorder %s15, 7
    %p80 = por %p78, %p79
    %p82 = scmp.ne.s32.totalorder %s67, %s81
    %p83 = scmp.eq.s32.totalorder %s15, 0
    %p84 = por %p82, %p83
    %s85 = ssub.s32 %s9, %s16
    %p86 = scmp.eq.s32.totalorder %s85, 0
    %s88 = sadd.s32 %s87, 1
    %s89 = scalar_select %p86, %s87, %s88
    %p92 = pneg %p86
    %p93 = scmp.eq.s32.totalorder %s9, 7
    %p94 = por %p92, %p93
    %p95 = scmp.ne.s32.totalorder %s87, %s90
    %p96 = scmp.eq.s32.totalorder %s9, 0
    %p97 = por %p95, %p96
    %p98 = scmp.ne.s32.totalorder %s87, %s90
    %p99 = scmp.eq.s32.totalorder %s14, 7
    %p100 = por %p98, %p99
    %p101 = scmp.ne.s32.totalorder %s90, %s91
    %p102 = scmp.eq.s32.totalorder %s14, 0
    %p103 = por %p101, %p102
    %p104 = scmp.ne.s32.totalorder %s90, %s91
    %p105 = scmp.eq.s32.totalorder %s15, 7
    %p106 = por %p104, %p105
    %p108 = scmp.ne.s32.totalorder %s91, %s107
    %p109 = scmp.eq.s32.totalorder %s15, 0
    %p110 = por %p108, %p109
    %p111 = scmp.le.s32.totalorder 1, %s9
    %p112 = scmp.lt.s32.totalorder %s9, 9
    %p113 = pnand %p111, %p112
    %p114 = pneg %p113
    // Predicated region
    $region9: #{transition_forward.1} parent=5 // pred_check
      _
    $region10: #{transition_forward.1} parent=5 // pred_check_branch
      %116 = sbr.rel (%p113) target = $region12
    $region11: #{transition_forward.1} parent=5 // pred_region
      %s117 = ssub.s32 %s9, 1
      // Predicated region
      $region13: #{transition_forward.1} parent=11 // pred_check
        %p118 = pneg %p56
      $region14: #{transition_forward.1} parent=11 // pred_check_branch
        %120 = sbr.rel (%p118) target = $region16
      $region15: #{transition_forward.1} parent=11 // pred_region
        _
      $region16: #{transition_forward.1} parent=11 // pred_fallthru
        _
      // Predicated region
      $region17: #{transition_forward.1} parent=11 // pred_check
        %p121 = pneg %p77
      $region18: #{transition_forward.1} parent=11 // pred_check_branch
        %123 = sbr.rel (%p121) target = $region20
      $region19: #{transition_forward.1} parent=11 // pred_region
        _
      $region20: #{transition_forward.1} parent=11 // pred_fallthru
        _
    $region12: #{transition_forward.1} parent=5 // pred_fallthru
      _
    %p124 = scmp.lt.s32.totalorder %s9, 8
    // Predicated region
    $region21: #{transition_forward.1} parent=5 // pred_check
      %p125 = pneg %p124
    $region22: #{transition_forward.1} parent=5 // pred_check_branch
      %127 = sbr.rel (%p125) target = $region24
    $region23: #{transition_forward.1} parent=5 // pred_region
      // Predicated region
      $region25: #{transition_forward.1} parent=23 // pred_check
        %p128 = pneg %p29
      $region26: #{transition_forward.1} parent=23 // pred_check_branch
        %130 = sbr.rel (%p128) target = $region28
      $region27: #{transition_forward.1} parent=23 // pred_region
        %s131 = smul.u32 2, %s9
        %p132 = scmp.lt.s32.totalorder %s131, 15
        %s133 = scalar_select %p132, %s131, 15
        %s134 = smul.addr %s133, 4
        %s135 = smul.addr %s134, 4
        %s136 = scalar_lea.vmem %s0, %s135
        %s137 = smul.u32 2, %s9
      $region28: #{transition_forward.1} parent=23 // pred_fallthru
        _
    $region24: #{transition_forward.1} parent=5 // pred_fallthru
      _
    %p138 = scmp.le.s32.totalorder 1, %s9
    %p139 = scmp.lt.s32.totalorder %s9, 9
    %p140 = pnand %p138, %p139
    %p141 = pneg %p140
    // Predicated region
    $region29: #{transition_forward.1} parent=5 // pred_check
      _
    $region30: #{transition_forward.1} parent=5 // pred_check_branch
      %143 = sbr.rel (%p140) target = $region32
    $region31: #{transition_forward.1} parent=5 // pred_region
      %s144 = ssub.s32 %s9, 1
      %s145 = smul.u32 2, %s14
      %p146 = scmp.lt.s32.totalorder %s145, 15
      %s147 = scalar_select %p146, %s145, 15
      %s148 = smul.addr %s147, 4
      %s149 = smul.addr %s148, 4
      %s150 = scalar_lea.vmem %s0, %s149
      %p151 = pneg %p35
      %p152 = pneg %p32
      %p153 = pneg %p56
      %p154 = pneg %p53
      %p155 = pneg %p77
      %p156 = pneg %p74
      %p157 = pneg %p103
      %p158 = pneg %p100
      %s159 = smul.u32 2, %s14
      %p160 = scmp.lt.s32.totalorder %s159, 15
      %s161 = scalar_select %p160, %s159, 15
      %s162 = smul.addr %s161, 4
      %s163 = scalar_lea.vmem %s3, %s162
      %s164 = smul.u32 2, %s14
      %p165 = scmp.lt.s32.totalorder %s164, 15
      %s166 = scalar_select %p165, %s164, 15
      %s167 = smul.addr %s166, 4
      %s168 = smul.addr %s167, 4
      %s169 = scalar_lea.vmem %s0, %s168
      %s170 = smul.u32 2, %s14
      %s171 = smul.u32 2, %s14
      %p172 = scmp.lt.s32.totalorder %s171, 15
      %s173 = scalar_select %p172, %s171, 15
      %s174 = smul.addr %s173, 4
      %s175 = scalar_lea.vmem %s3, %s174
      %s176 = smul.u32 2, %s14
      %v178 = vld [vmem:[%s169] sm:$0xff]
      %v179 = vld [vmem:[%s169 + $0x8] sm:$0xff]
      %v180 = vld [vmem:[%s169 + $0x10] sm:$0xff]
      %v181 = vld [vmem:[%s169 + $0x18] sm:$0xff]
      %v182 = vadd.bf16 %v178, %v179
      %v183 = vadd.bf16 %v180, %v181
      %v184 = vld [vmem:[%s1] sm:$0xf]
      %v185 = vld [vmem:[%s1 + $0x4] sm:$0xf]
      %v186 = vld [vmem:[%s1 + $0x8] sm:$0xf]
      %v187 = vld [vmem:[%s1 + $0xc] sm:$0xf]
      %v188 = vld [vmem:[%s1 + $0x10] sm:$0xf]
      %v189 = vld [vmem:[%s1 + $0x14] sm:$0xf]
      %v190 = vld [vmem:[%s1 + $0x18] sm:$0xf]
      %v191 = vld [vmem:[%s1 + $0x1c] sm:$0xf]
      %v192 = vld [vmem:[%s1 + $0x20] sm:$0xf]
      %v193 = vld [vmem:[%s1 + $0x24] sm:$0xf]
      %v194 = vld [vmem:[%s1 + $0x28] sm:$0xf]
      %v195 = vld [vmem:[%s1 + $0x2c] sm:$0xf]
      %v196 = vld [vmem:[%s1 + $0x30] sm:$0xf]
      %v197 = vld [vmem:[%s1 + $0x34] sm:$0xf]
      %v198 = vld [vmem:[%s1 + $0x38] sm:$0xf]
      %v199 = vld [vmem:[%s1 + $0x3c] sm:$0xf]
      %v200 = vld [vmem:[%s1 + $0x40] sm:$0xf]
      %v201 = vld [vmem:[%s1 + $0x44] sm:$0xf]
      %v202 = vld [vmem:[%s1 + $0x48] sm:$0xf]
      %v203 = vld [vmem:[%s1 + $0x4c] sm:$0xf]
      %v204 = vld [vmem:[%s1 + $0x50] sm:$0xf]
      %v205 = vld [vmem:[%s1 + $0x54] sm:$0xf]
      %v206 = vld [vmem:[%s1 + $0x58] sm:$0xf]
      %v207 = vld [vmem:[%s1 + $0x5c] sm:$0xf]
      %v208 = vld [vmem:[%s1 + $0x60] sm:$0xf]
      %v209 = vld [vmem:[%s1 + $0x64] sm:$0xf]
      %v210 = vld [vmem:[%s1 + $0x68] sm:$0xf]
      %v211 = vld [vmem:[%s1 + $0x6c] sm:$0xf]
      %v212 = vld [vmem:[%s1 + $0x70] sm:$0xf]
      %v213 = vld [vmem:[%s1 + $0x74] sm:$0xf]
      %v214 = vld [vmem:[%s1 + $0x78] sm:$0xf]
      %v215 = vld [vmem:[%s1 + $0x7c] sm:$0xf]
      %v216 = vld [vmem:[%s2] sm:$0x1]
      %v218 = vlaneseq
      %v219 = vshrl.u32 %v218, 7
      %v220 = vsub.s32 0, %v219
      %v221 = vrot.slane %v216, %v220
      %v225 = vunpack.c.l.b16 %v182
      %v226 = vunpack.c.h.b16 %v182
      %v227 = vunpack.c.l.b16 %v183
      %v228 = vunpack.c.h.b16 %v183
      %v229 = vpack.c.b16 %v227, %v225
      %v230 = vpack.c.b16 %v228, %v226
      %v265 = vunpack.c.l.b16 %v184
      %v266 = vunpack.c.l.b16 %v185
      %v267 = vunpack.c.l.b16 %v186
      %v268 = vunpack.c.l.b16 %v187
      %v269 = vunpack.c.l.b16 %v188
      %v270 = vunpack.c.l.b16 %v189
      %v271 = vunpack.c.l.b16 %v190
      %v272 = vunpack.c.l.b16 %v191
      %v273 = vunpack.c.l.b16 %v192
      %v274 = vunpack.c.l.b16 %v193
      %v275 = vunpack.c.l.b16 %v194
      %v276 = vunpack.c.l.b16 %v195
      %v277 = vunpack.c.l.b16 %v196
      %v278 = vunpack.c.l.b16 %v197
      %v279 = vunpack.c.l.b16 %v198
      %v280 = vunpack.c.l.b16 %v199
      %v281 = vunpack.c.l.b16 %v200
      %v282 = vunpack.c.l.b16 %v201
      %v283 = vunpack.c.l.b16 %v202
      %v284 = vunpack.c.l.b16 %v203
      %v285 = vunpack.c.l.b16 %v204
      %v286 = vunpack.c.l.b16 %v205
      %v287 = vunpack.c.l.b16 %v206
      %v288 = vunpack.c.l.b16 %v207
      %v289 = vunpack.c.l.b16 %v208
      %v290 = vunpack.c.l.b16 %v209
      %v291 = vunpack.c.l.b16 %v210
      %v292 = vunpack.c.l.b16 %v211
      %v293 = vunpack.c.l.b16 %v212
      %v294 = vunpack.c.l.b16 %v213
      %v295 = vunpack.c.l.b16 %v214
      %v296 = vunpack.c.l.b16 %v215
      %v297 = vpack.c.b16 %v266, %v265
      %v298 = vpack.c.b16 %v268, %v267
      %v299 = vpack.c.b16 %v270, %v269
      %v300 = vpack.c.b16 %v272, %v271
      %v301 = vpack.c.b16 %v274, %v273
      %v302 = vpack.c.b16 %v276, %v275
      %v303 = vpack.c.b16 %v278, %v277
      %v304 = vpack.c.b16 %v280, %v279
      %v305 = vpack.c.b16 %v282, %v281
      %v306 = vpack.c.b16 %v284, %v283
      %v307 = vpack.c.b16 %v286, %v285
      %v308 = vpack.c.b16 %v288, %v287
      %v309 = vpack.c.b16 %v290, %v289
      %v310 = vpack.c.b16 %v292, %v291
      %v311 = vpack.c.b16 %v294, %v293
      %v312 = vpack.c.b16 %v296, %v295
      %329 = vmatprep.subr.bf16.mxu0 0
      %330 = vmatpush1.bf16.msra.mxu0 %v304
      %331 = vmatprep.subr.bf16.mxu0 0
      %332 = vmatpush1.bf16.msra.mxu0 %v303
      %333 = vmatprep.subr.bf16.mxu0 0
      %334 = vmatpush1.bf16.msra.mxu0 %v302
      %335 = vmatprep.subr.bf16.mxu0 0
      %336 = vmatpush1.bf16.msra.mxu0 %v301
      %337 = vmatprep.subr.bf16.mxu0 0
      %338 = vmatpush1.bf16.msra.mxu0 %v300
      %339 = vmatprep.subr.bf16.mxu0 0
      %340 = vmatpush1.bf16.msra.mxu0 %v299
      %341 = vmatprep.subr.bf16.mxu0 0
      %342 = vmatpush1.bf16.msra.mxu0 %v298
      %343 = vmatprep.subr.bf16.mxu0 0
      %344 = vmatpush1.bf16.msra.mxu0 %v297
      %345 = vmatprep.subr.bf16.mxu0 0
      %346 = vmatpush2.bf16.msra.mxu0 %v312
      %347 = vmatprep.subr.bf16.mxu0 0
      %348 = vmatpush2.bf16.msra.mxu0 %v311
      %349 = vmatprep.subr.bf16.mxu0 0
      %350 = vmatpush2.bf16.msra.mxu0 %v310
      %351 = vmatprep.subr.bf16.mxu0 0
      %352 = vmatpush2.bf16.msra.mxu0 %v309
      %353 = vmatprep.subr.bf16.mxu0 0
      %354 = vmatpush2.bf16.msra.mxu0 %v308
      %355 = vmatprep.subr.bf16.mxu0 0
      %356 = vmatpush2.bf16.msra.mxu0 %v307
      %357 = vmatprep.subr.bf16.mxu0 0
      %358 = vmatpush2.bf16.msra.mxu0 %v306
      %359 = vmatprep.subr.bf16.mxu0 0
      %360 = vmatpush2.bf16.msra.mxu0 %v305
      %361 = vmatprep.mubr.bf16.mxu0 %v230
      %362 = vmatmul.mubr.bf16.gmra.mxu0 %v229
      %v363 = vpop.f32.mrf.mxu0
      %v364 = vadd.f32 %v221, %v363
      %v365 = vpop.f32.mrf.mxu0
      %v366 = vpop.f32.mrf.mxu0
      %v367 = vadd.f32 %v221, %v366
      %v368 = vpop.f32.mrf.mxu0
      %369 = vdwg.mxu0
      %v370 = vpack.c.bf16 %v367, %v364
      %v372 = vunpack.c.l.b16 %v370
      %v373 = vunpack.c.h.b16 %v370
      %v374 = vpack.c.b16 %v372, %v372
      %v375 = vpack.c.b16 %v373, %v373
      %378 = vst [vmem:[%s175] sm:$0xf] %v374
      %379 = vst [vmem:[%s175 + $0x4] sm:$0xf] %v375
      %s380 = smul.u32 2, %s14
      %p381 = scmp.lt.s32.totalorder %s380, 15
      %s382 = scalar_select %p381, %s380, 15
      %s383 = smul.addr %s382, 4
      %s384 = scalar_lea.vmem %s3, %s383
      // Predicated region
      $region33: #{transition_forward.1} parent=31 // pred_check
        %p385 = pneg %p100
      $region34: #{transition_forward.1} parent=31 // pred_check_branch
        %387 = sbr.rel (%p385) target = $region36
      $region35: #{transition_forward.1} parent=31 // pred_region
        %s388 = smul.u32 2, %s14
      $region36: #{transition_forward.1} parent=31 // pred_fallthru
        _
    $region32: #{transition_forward.1} parent=5 // pred_fallthru
      _
    %p389 = scmp.le.s32.totalorder 2, %s9
    // Predicated region
    $region37: #{transition_forward.1} parent=5 // pred_check
      %p390 = pneg %p389
    $region38: #{transition_forward.1} parent=5 // pred_check_branch
      %392 = sbr.rel (%p390) target = $region40
    $region39: #{transition_forward.1} parent=5 // pred_region
      %s393 = ssub.s32 %s9, 2
      // Predicated region
      $region41: #{transition_forward.1} parent=39 // pred_check
        %p394 = pneg %p106
      $region42: #{transition_forward.1} parent=39 // pred_check_branch
        %396 = sbr.rel (%p394) target = $region44
      $region43: #{transition_forward.1} parent=39 // pred_region
        %s397 = smul.u32 2, %s15
        %p398 = scmp.lt.s32.totalorder %s397, 15
        %s399 = scalar_select %p398, %s397, 15
        %s400 = smul.addr %s399, 4
        %s401 = scalar_lea.vmem %s3, %s400
      $region44: #{transition_forward.1} parent=39 // pred_fallthru
        _
    $region40: #{transition_forward.1} parent=5 // pred_fallthru
      _
  $region6: #{transition_forward.1} parent=0 // loop_footer
    %s13 = sadd.s32 1, %s9
  $region7: #{transition_forward.1} parent=0 // loop_footer_branch
    %8 = sbr.rel target = $region3
  $region8: #{transition_forward.1} parent=0 // loop_exit
    _

</llo_original>
